<compile_context>
chip_gen: v6e
topology: v6e:2x2x1
jax: 0.10.0
libtpu: 0.0.40
codegen_flags: <defaults>
</compile_context>

<pallas_src>
import jax
import jax.numpy as jnp
from jax.experimental import pallas as pl
from jax.experimental.pallas import tpu as pltpu


_SMALL_FAST_PATH_ELEMS = 64 * 1024   # below this, plain jnp (XLA fuses into producer)
_FULL_BLOCK_BYTES = 4 << 20          # per-field (in+out) bytes before switching to tiling
_TILE_ROWS = 512                     # row tile for the tiled path (~85% of HBM roofline)


def _out_dtype(dtype):
    """Float fields keep their dtype; integer fields are promoted to float32."""
    return dtype if jnp.issubdtype(dtype, jnp.floating) else jnp.float32


def _jnp_rescale(v, scale_by: float):
    return (v.astype(jnp.float32) * jnp.float32(scale_by)).astype(_out_dtype(v.dtype))


# ---------------------------------------------------------------------------
# Full-block path: ONE pallas_call, every (small/medium) field as its own ref.
# No packing, no padding, one HBM read + one HBM write per field.
# ---------------------------------------------------------------------------
def _rescale_full_block(fields: dict, scale_by: float) -> dict:
    names = list(fields.keys())
    vals_2d = []
    orig_shapes = []
    for n in names:
        v = fields[n]
        orig_shapes.append(v.shape)
        if v.ndim >= 2:
            vals_2d.append(v)
        elif v.ndim == 1:
            vals_2d.append(v.reshape(1, -1))
        else:
            vals_2d.append(v.reshape(1, 1))
    out_dts = [_out_dtype(v.dtype) for v in vals_2d]
    nf = len(vals_2d)

    def kernel(scale_ref, *refs):
        s = scale_ref[0]
        for i in range(nf):
            x_ref = refs[i]
            o_ref = refs[nf + i]
            o_ref[...] = (x_ref[...].astype(jnp.float32) * s).astype(o_ref.dtype)

    scale = jnp.asarray([scale_by], dtype=jnp.float32)
    outs = pl.pallas_call(
        kernel,
        out_shape=tuple(jax.ShapeDtypeStruct(v.shape, dt)
                        for v, dt in zip(vals_2d, out_dts)),
        in_specs=[pl.BlockSpec(memory_space=pltpu.MemorySpace.SMEM)]
                 + [pl.BlockSpec(memory_space=pltpu.MemorySpace.VMEM)
                    for _ in vals_2d],
        out_specs=tuple(pl.BlockSpec(memory_space=pltpu.MemorySpace.VMEM)
                        for _ in vals_2d),
    )(scale, *vals_2d)

    return {n: o.reshape(shp) for n, o, shp in zip(names, outs, orig_shapes)}


# ---------------------------------------------------------------------------
# Tiled path for large fields: lane-dense when possible, rows pipelined with
# BlockSpec double-buffering, "parallel" axis for megacore, in/out aliasing.
# ---------------------------------------------------------------------------
def _rescale_tiled(v, scale_by: float):
    out_dt = _out_dtype(v.dtype)
    size = int(v.size)
    if size % 128 == 0:
        cols = 128                       # lane-dense -> unmasked vst
    else:
        cols = int(v.shape[-1])          # natural trailing dim (== full array dim)
    rows = size // cols
    mat = v.reshape(rows, cols)          # contiguous reshape; no data movement

    if rows >= 2 * _TILE_ROWS:
        tile = _TILE_ROWS
    elif rows >= 16:
        # Split medium arrays into >= 2 tiles so both v7x TensorCores get work.
        tile = max(8, ((rows // 2) // 8) * 8)
    else:
        tile = rows                      # single full-extent block
    grid = (pl.cdiv(rows, tile),)

    def kernel(scale_ref, x_ref, o_ref):
        s = scale_ref[0]
        o_ref[...] = (x_ref[...].astype(jnp.float32) * s).astype(o_ref.dtype)

    scale = jnp.asarray([scale_by], dtype=jnp.float32)
    aliases = {1: 0} if jnp.dtype(out_dt) == jnp.dtype(mat.dtype) else {}
    out = pl.pallas_call(
        kernel,
        out_shape=jax.ShapeDtypeStruct((rows, cols), out_dt),
        grid=grid,
        in_specs=[pl.BlockSpec(memory_space=pltpu.MemorySpace.SMEM),
                  pl.BlockSpec((tile, cols), lambda i: (i, 0))],
        out_specs=pl.BlockSpec((tile, cols), lambda i: (i, 0)),
        input_output_aliases=aliases,
        compiler_params=pltpu.CompilerParams(
            dimension_semantics=("parallel",)),
    )(scale, mat)
    return out.reshape(v.shape)


# ---------------------------------------------------------------------------
# Public entry: RescaleOutput forward scaling over all scale_keys fields.
# ---------------------------------------------------------------------------
def rescale_fields(fields: dict, scale_by: float, *, force_pallas: bool = False) -> dict:
    names = list(fields.keys())
    if not names:
        return {}

    total = sum(int(fields[n].size) for n in names)
    if not force_pallas and total < _SMALL_FAST_PATH_ELEMS:
        # Fast path: at nequip-realistic sizes kernel-launch latency dominates;
        # XLA fuses a scalar multiply into the producer for free.
        return {n: _jnp_rescale(fields[n], scale_by) for n in names}

    small = {}
    result = {}
    for n in names:
        v = fields[n]
        nbytes = int(v.size) * (v.dtype.itemsize
                                + jnp.dtype(_out_dtype(v.dtype)).itemsize)
        if nbytes <= _FULL_BLOCK_BYTES:
            small[n] = v
        else:
            result[n] = _rescale_tiled(v, scale_by)
    if small:
        result.update(_rescale_full_block(small, scale_by))
    return result


# ---------------------------------------------------------------------------
# Synthetic inner "GraphModuleMixin" model (plain-JAX glue): produces the
# output fields that RescaleOutput will rescale. Deterministic weights.
# ---------------------------------------------------------------------------
class TinyGraphModel:
    def __init__(self, key, hidden=32):
        k1, k2 = jax.random.split(key)
        self.w_energy = jax.random.normal(k1, (hidden, 1), dtype=jnp.float32) * 0.1
        self.w_forces = jax.random.normal(k2, (hidden, 3), dtype=jnp.float32) * 0.1
        self.irreps_out = {"total_energy": None, "forces": None, "node_features": None}
        self.irreps_in = {"node_features": None}

    def __call__(self, data):
        feats = data["node_features"]                      # [N, hidden]
        batch = data["batch"]                              # [N] graph index per atom
        n_graphs = int(data["n_graphs"])
        per_atom_e = feats @ self.w_energy                 # [N, 1]
        total_energy = jax.ops.segment_sum(
            per_atom_e, batch, num_segments=n_graphs)      # [B, 1]
        forces = feats @ self.w_forces                     # [N, 3]
        out = dict(data)
        out["total_energy"] = total_energy
        out["forces"] = forces
        return out


# ---------------------------------------------------------------------------
# RescaleOutput wrapper (forward semantics of the PyTorch module)
# ---------------------------------------------------------------------------
class RescaleOutput:
    def __init__(self, model, scale_keys, scale_by: float):
        self.model = model
        scale_keys = [scale_keys] if isinstance(scale_keys, str) else list(scale_keys)
        for k in scale_keys:
            if k not in model.irreps_out:
                raise KeyError(
                    f"Asked to scale '{k}', but '{k}' is not in the outputs of the provided model.")
        self.scale_keys = scale_keys
        self.scale_by = float(scale_by)

    def __call__(self, data):
        data = self.model(data)
        out = dict(data)
        scaled = rescale_fields({k: out[k] for k in self.scale_keys}, self.scale_by)
        out.update(scaled)
        return out


# ---------------------------------------------------------------------------
if __name__ == "__main__":
    key = jax.random.PRNGKey(0)
    k_model, k_feat, k_big = jax.random.split(key, 3)

    N_ATOMS = 16
    HIDDEN = 32
    N_GRAPHS = 2
    SCALE_BY = 2.5

    node_features = jax.random.normal(k_feat, (N_ATOMS, HIDDEN), dtype=jnp.float32)
    batch = jnp.concatenate([
        jnp.zeros((N_ATOMS // 2,), dtype=jnp.int32),
        jnp.ones((N_ATOMS // 2,), dtype=jnp.int32),
    ])
    data = {"node_features": node_features, "batch": batch, "n_graphs": N_GRAPHS}

    inner = TinyGraphModel(k_model, hidden=HIDDEN)
    rescaled = RescaleOutput(inner, scale_keys=["total_energy", "forces"],
                             scale_by=SCALE_BY)

    # 1) Module forward (auto path; small inputs take the fused fast path).
    out = rescaled(data)
    jax.block_until_ready(out["forces"])
    jax.block_until_ready(out["total_energy"])

    ref = inner(data)
    ref_forces = ref["forces"] * SCALE_BY
    ref_energy = ref["total_energy"] * SCALE_BY
    assert out["forces"].shape == (N_ATOMS, 3)
    assert out["total_energy"].shape == (N_GRAPHS, 1)
    assert jnp.allclose(out["forces"], ref_forces, rtol=1e-6, atol=1e-6)
    assert jnp.allclose(out["total_energy"], ref_energy, rtol=1e-6, atol=1e-6)

    # 2) Exercise the fused multi-field full-block Pallas kernel explicitly.
    pal = rescale_fields({"total_energy": ref["total_energy"],
                          "forces": ref["forces"]},
                         SCALE_BY, force_pallas=True)
    jax.block_until_ready(pal["forces"])
    assert pal["forces"].dtype == ref["forces"].dtype
    assert jnp.allclose(pal["forces"], ref_forces, rtol=1e-6, atol=1e-6)
    assert jnp.allclose(pal["total_energy"], ref_energy, rtol=1e-6, atol=1e-6)

    # 3) bf16 field: output dtype is preserved (multiply done in f32 in-register).
    xb = ref["forces"].astype(jnp.bfloat16)
    pb = rescale_fields({"forces": xb}, SCALE_BY, force_pallas=True)["forces"]
    jax.block_until_ready(pb)
    assert pb.dtype == jnp.bfloat16
    assert jnp.allclose(pb.astype(jnp.float32),
                        xb.astype(jnp.float32) * SCALE_BY, rtol=1e-2, atol=1e-3)

    # 4) Exercise the row-tiled, lane-dense Pallas path.
    big = jax.random.normal(k_big, (1024, 128), dtype=jnp.float32)
    ref_big = big * SCALE_BY
    tiled = _rescale_tiled(big, SCALE_BY)
    jax.block_until_ready(tiled)
    assert tiled.shape == (1024, 128) and tiled.dtype == jnp.float32
    assert jnp.allclose(tiled, ref_big, rtol=1e-6, atol=1e-6)

    print("KERNEL_OK")
</pallas_src>

<mosaic_0001>
module attributes {stable_mosaic.version = 11 : i64} {
  func.func @kernel(%arg0: memref<1xf32, #tpu.memory_space<smem>>, %arg1: memref<2x1xf32, #tpu.memory_space<vmem>>, %arg2: memref<16x3xf32, #tpu.memory_space<vmem>>, %arg3: memref<2x1xf32, #tpu.memory_space<vmem>>, %arg4: memref<16x3xf32, #tpu.memory_space<vmem>>) attributes {dimension_semantics = [], scalar_prefetch = 0 : i64, scratch_operands = 0 : i64, tpu.core_type = #tpu.core_type<tc>} {
    %c0 = arith.constant 0 : index
    %0 = memref.load %arg0[%c0] : memref<1xf32, #tpu.memory_space<smem>>
    %c0_0 = arith.constant 0 : index
    %c0_1 = arith.constant 0 : index
    %1 = vector.load %arg1[%c0_0, %c0_1] : memref<2x1xf32, #tpu.memory_space<vmem>>, vector<2x1xf32>
    %2 = vector.broadcast %0 : f32 to vector<2x1xf32>
    %3 = arith.mulf %1, %2 : vector<2x1xf32>
    %c0_2 = arith.constant 0 : index
    %c0_3 = arith.constant 0 : index
    %4 = vector.load %arg3[%c0_2, %c0_3] : memref<2x1xf32, #tpu.memory_space<vmem>>, vector<2x1xf32>
    tpu.vector_store %arg3[%c0_2, %c0_3], %3 {strides = array<i32>} : memref<2x1xf32, #tpu.memory_space<vmem>>, vector<2x1xf32>,
    %c0_4 = arith.constant 0 : index
    %c0_5 = arith.constant 0 : index
    %5 = vector.load %arg2[%c0_4, %c0_5] : memref<16x3xf32, #tpu.memory_space<vmem>>, vector<16x3xf32>
    %6 = vector.broadcast %0 : f32 to vector<16x3xf32>
    %7 = arith.mulf %5, %6 : vector<16x3xf32>
    %c0_6 = arith.constant 0 : index
    %c0_7 = arith.constant 0 : index
    %8 = vector.load %arg4[%c0_6, %c0_7] : memref<16x3xf32, #tpu.memory_space<vmem>>, vector<16x3xf32>
    tpu.vector_store %arg4[%c0_6, %c0_7], %7 {strides = array<i32>} : memref<16x3xf32, #tpu.memory_space<vmem>>, vector<16x3xf32>,
    return
  }
}

</mosaic_0001>

<llo_original>
// kernel: tpu_custom_call.1
$region0: #{tpu_custom_call.1}
  #allocation0 [shape = 'u32[]', space=smem, size = 0x4, offset = 0x4, fixed_abs, tag = 'smem constant byte address 0x4 - core index']
  #allocation1 [shape = 'u32[144,128]{1,0:T(1,128)}', space=vmem, size = 0x12000, scoped, tag = 'internal scratch']
  #allocation2 [shape = 'f32[1]{0:T(128)S(6)}', space=smem, size = 0x200, scoped, tag = 'scoped memory for tpu_custom_call.1']
  %s0 = inlined_call_operand.<no memory space> [shape: f32[1], index: 0, kind: input, shape index: {}]
  %s1 = inlined_call_operand.vmem [shape: f32[2,1], index: 1, kind: input, shape index: {}]
  %s2 = inlined_call_operand.vmem [shape: f32[16,3], index: 2, kind: input, shape index: {}]
  %s3 = inlined_call_operand.vmem [shape: f32[2,1], index: 3, kind: output, shape index: {0}]
  %s4 = inlined_call_operand.vmem [shape: f32[16,3], index: 4, kind: output, shape index: {1}]
  %5 = xla_tuple %s3, %s4
  %s6 = sld [smem:[#allocation0]]
  $region30: #{tpu_custom_call.1} parent=0
    _
  %s8 = ssub.s32 1, %s6
  %s9 = scalar_select 0, %s8, %s6
  %10 = sst [smem:[#allocation2]] %s0
  // Predicated region
  $region2: #{tpu_custom_call.1} parent=0 // pred_check
    _
  $region3: #{tpu_custom_call.1} parent=0 // pred_check_branch
    %12 = sbr.rel (0) target = $region5
  $region4: #{tpu_custom_call.1} parent=0 // pred_region
    _
  $region5: #{tpu_custom_call.1} parent=0 // pred_fallthru
    _
  // Predicated region
  $region6: #{tpu_custom_call.1} parent=0 // pred_check
    _
  $region7: #{tpu_custom_call.1} parent=0 // pred_check_branch
    %14 = sbr.rel (0) target = $region9
  $region8: #{tpu_custom_call.1} parent=0 // pred_region
    _
  $region9: #{tpu_custom_call.1} parent=0 // pred_fallthru
    _
  // Predicated region
  $region10: #{tpu_custom_call.1} parent=0 // pred_check
    _
  $region11: #{tpu_custom_call.1} parent=0 // pred_check_branch
    %16 = sbr.rel (0) target = $region13
  $region12: #{tpu_custom_call.1} parent=0 // pred_region
    _
  $region13: #{tpu_custom_call.1} parent=0 // pred_fallthru
    _
  %s17 = sld [smem:[#allocation2]]
  %v18 = vld [vmem:[%s1] sm:$0x3]
  %v19 = vstv %s17
  %v20 = vmul.f32 %v18, %v19
  %vm21 = vcmask 1024
  %22 = vst.msk [vmem:[%s3] sm:$0x3] %vm21, %v20
  %v23 = vld [vmem:[%s2] sm:$0xff]
  %v24 = vld [vmem:[%s2 + $0x8] sm:$0xff]
  %v25 = vmul.f32 %v23, %v19
  %v26 = vmul.f32 %v24, %v19
  %vm27 = vcmask 23552
  %28 = vst.msk [vmem:[%s4] sm:$0xff] %vm27, %v25
  %29 = vst.msk [vmem:[%s4 + $0x8] sm:$0xff] %vm27, %v26
  // Predicated region
  $region14: #{tpu_custom_call.1} parent=0 // pred_check
    _
  $region15: #{tpu_custom_call.1} parent=0 // pred_check_branch
    %31 = sbr.rel (0) target = $region17
  $region16: #{tpu_custom_call.1} parent=0 // pred_region
    _
  $region17: #{tpu_custom_call.1} parent=0 // pred_fallthru
    _
  // Predicated region
  $region18: #{tpu_custom_call.1} parent=0 // pred_check
    _
  $region19: #{tpu_custom_call.1} parent=0 // pred_check_branch
    %33 = sbr.rel (0) target = $region21
  $region20: #{tpu_custom_call.1} parent=0 // pred_region
    _
  $region21: #{tpu_custom_call.1} parent=0 // pred_fallthru
    _
  // Predicated region
  $region22: #{tpu_custom_call.1} parent=0 // pred_check
    _
  $region23: #{tpu_custom_call.1} parent=0 // pred_check_branch
    %35 = sbr.rel (0) target = $region25
  $region24: #{tpu_custom_call.1} parent=0 // pred_region
    _
  $region25: #{tpu_custom_call.1} parent=0 // pred_fallthru
    _
  // Predicated region
  $region26: #{tpu_custom_call.1} parent=0 // pred_check
    _
  $region27: #{tpu_custom_call.1} parent=0 // pred_check_branch
    %37 = sbr.rel (0) target = $region29
  $region28: #{tpu_custom_call.1} parent=0 // pred_region
    _
  $region29: #{tpu_custom_call.1} parent=0 // pred_fallthru
    _

</llo_original>
